<compile_context>
chip_gen: v5e
topology: v5e:2x2
jax: 0.10.0
libtpu: 0.0.40
codegen_flags: <defaults>
</compile_context>

<pallas_src>
import functools
import math

import jax
import jax.numpy as jnp
from jax.experimental import pallas as pl
from jax.experimental.pallas import tpu as pltpu


def _full_attention_kernel(q_ref, k_ref, v_ref, o_ref, *, scale, causal):
    q = q_ref[...]          # (G_blk, L, E)
    k = k_ref[...]          # (G_blk, S, E)
    v = v_ref[...]          # (G_blk, S, Dv)

    # Batched scores over the group (= batch*head) axis: (G_blk, L, S).
    s = jax.lax.dot_general(
        q, k, (((2,), (2,)), ((0,), (0,))),
        preferred_element_type=jnp.float32) * scale

    if causal:
        L, S = s.shape[1], s.shape[2]
        row = jax.lax.broadcasted_iota(jnp.int32, (L, S), 0)
        col = jax.lax.broadcasted_iota(jnp.int32, (L, S), 1)
        s = jnp.where((col > row)[None, :, :], -jnp.inf, s)

    # Softmax over S in f32; reciprocal goes to the EUP.
    m = jnp.max(s, axis=-1, keepdims=True)
    e = jnp.exp(s - m)
    a = e * pl.reciprocal(jnp.sum(e, axis=-1, keepdims=True), approx=True)

    o = jax.lax.dot_general(
        a.astype(v.dtype), v, (((2,), (1,)), ((0,), (0,))),
        preferred_element_type=jnp.float32)
    o_ref[...] = o.astype(o_ref.dtype)


def full_attention(queries, keys, values, attn_mask=None, *,
                   mask_flag=True, scale=None, output_attention=False):
    """Pallas port of Informer FullAttention.forward (eval / no dropout)."""
    B, L, H, E = queries.shape
    _, S, _, Dv = values.shape
    sc = scale if scale is not None else 1.0 / math.sqrt(E)
    if mask_flag:
        # TODO(synk): only the default TriangularCausalMask is supported; an
        # arbitrary user-supplied attn_mask would need to be passed as an input.
        assert attn_mask is None and L == S

    # Fold (B, H) into one group axis, head-major within each batch element.
    qg = jnp.transpose(queries, (0, 2, 1, 3)).reshape(B * H, L, E)
    kg = jnp.transpose(keys, (0, 2, 1, 3)).reshape(B * H, S, E)
    vg = jnp.transpose(values, (0, 2, 1, 3)).reshape(B * H, S, Dv)
    G = B * H
    # Two grid steps -> both v7x TensorCores busy; otherwise one fused block.
    g_blk = G // 2 if (G % 2 == 0 and G >= 2) else G
    grid = (G // g_blk,)

    out = pl.pallas_call(
        functools.partial(_full_attention_kernel, scale=sc, causal=mask_flag),
        out_shape=jax.ShapeDtypeStruct((G, L, Dv), queries.dtype),
        grid=grid,
        in_specs=[
            pl.BlockSpec((g_blk, L, E), lambda g: (g, 0, 0)),
            pl.BlockSpec((g_blk, S, E), lambda g: (g, 0, 0)),
            pl.BlockSpec((g_blk, S, Dv), lambda g: (g, 0, 0)),
        ],
        out_specs=pl.BlockSpec((g_blk, L, Dv), lambda g: (g, 0, 0)),
        compiler_params=pltpu.CompilerParams(
            dimension_semantics=("parallel",)),
    )(qg, kg, vg)

    V = jnp.transpose(out.reshape(B, H, L, Dv), (0, 2, 1, 3))
    attn = None  # output_attention=False in the reference configuration
    return V, attn


def _reference(q, k, v, mask_flag=True, scale=None):
    """Pure-JAX reference mirroring the PyTorch module (eval mode)."""
    B, L, H, E = q.shape
    sc = scale if scale is not None else 1.0 / math.sqrt(E)
    s = jnp.einsum('blhe,bshe->bhls', q, k)
    if mask_flag:
        mask = jnp.triu(jnp.ones((L, L), bool), k=1)
        s = jnp.where(mask, -jnp.inf, s)
    a = jax.nn.softmax(sc * s, axis=-1)
    return jnp.einsum('bhls,bshd->blhd', a, v)


if __name__ == "__main__":
    key = jax.random.PRNGKey(0)
    kq, kk, kv = jax.random.split(key, 3)

    B, L, H, E = 2, 16, 4, 8          # d_model = H*E = 32
    q = jax.random.normal(kq, (B, L, H, E), jnp.float32)
    k = jax.random.normal(kk, (B, L, H, E), jnp.float32)
    v = jax.random.normal(kv, (B, L, H, E), jnp.float32)

    out, attn = full_attention(q, k, v)
    out = jax.block_until_ready(out)

    assert out.shape == (B, L, H, E), out.shape
    assert attn is None
    ref = _reference(q, k, v)
    max_err = float(jnp.max(jnp.abs(out - ref)))
    assert max_err < 2e-2, max_err
    print("KERNEL_OK")
</pallas_src>

<mosaic_0001>
module attributes {stable_mosaic.version = 11 : i64} {
  func.func @_full_attention_kernel(%arg0: i32, %arg1: memref<4x16x8xf32, #tpu.memory_space<vmem>>, %arg2: memref<4x16x8xf32, #tpu.memory_space<vmem>>, %arg3: memref<4x16x8xf32, #tpu.memory_space<vmem>>, %arg4: memref<4x16x8xf32, #tpu.memory_space<vmem>>) attributes {dimension_semantics = [#tpu.dimension_semantics<parallel>], iteration_bounds = array<i64: 2>, scalar_prefetch = 0 : i64, scratch_operands = 0 : i64, tpu.core_type = #tpu.core_type<tc>, window_params = [{transform_indices = @transform_0, window_bounds = array<i64: 4, 16, 8>}, {transform_indices = @transform_1, window_bounds = array<i64: 4, 16, 8>}, {transform_indices = @transform_2, window_bounds = array<i64: 4, 16, 8>}, {transform_indices = @transform_3, window_bounds = array<i64: 4, 16, 8>}]} {
    %c0 = arith.constant 0 : index
    %c0_0 = arith.constant 0 : index
    %c0_1 = arith.constant 0 : index
    %0 = vector.load %arg1[%c0, %c0_0, %c0_1] : memref<4x16x8xf32, #tpu.memory_space<vmem>>, vector<4x16x8xf32>
    %c0_2 = arith.constant 0 : index
    %c0_3 = arith.constant 0 : index
    %c0_4 = arith.constant 0 : index
    %1 = vector.load %arg2[%c0_2, %c0_3, %c0_4] : memref<4x16x8xf32, #tpu.memory_space<vmem>>, vector<4x16x8xf32>
    %c0_5 = arith.constant 0 : index
    %c0_6 = arith.constant 0 : index
    %c0_7 = arith.constant 0 : index
    %2 = vector.load %arg3[%c0_5, %c0_6, %c0_7] : memref<4x16x8xf32, #tpu.memory_space<vmem>>, vector<4x16x8xf32>
    %cst = arith.constant dense<0.000000e+00> : vector<4x16x16xf32>
    %3 = tpu.matmul %0, %1, %cst {dimension_numbers = #tpu.dot_dimension_numbers<[2], [2], [1], [1], [0, 0, 0, 1, 1, 1], [0], [0]>} : vector<4x16x8xf32>, vector<4x16x8xf32>, vector<4x16x16xf32> -> vector<4x16x16xf32>
    %cst_8 = arith.constant 0.353553385 : f32
    %4 = vector.broadcast %cst_8 : f32 to vector<4x16x16xf32>
    %5 = arith.mulf %3, %4 : vector<4x16x16xf32>
    %6 = tpu.iota {dimensions = array<i32: 0>} : vector<16x16xi32>
    %7 = tpu.iota {dimensions = array<i32: 1>} : vector<16x16xi32>
    %8 = arith.cmpi sgt, %7, %6 : vector<16x16xi32>
    %9 = vector.shape_cast %8 : vector<16x16xi1> to vector<1x16x16xi1>
    %cst_9 = arith.constant 0xFF800000 : f32
    %10 = vector.shape_cast %9 : vector<1x16x16xi1> to vector<1x16x16xi1>
    %11 = vector.broadcast %10 : vector<1x16x16xi1> to vector<4x16x16xi1>
    %12 = vector.broadcast %cst_9 : f32 to vector<4x16x16xf32>
    %13 = arith.select %11, %12, %5 : vector<4x16x16xi1>, vector<4x16x16xf32>
    %cst_10 = arith.constant dense<0xFF800000> : vector<4x16xf32>
    %14 = vector.multi_reduction <maximumf>, %13, %cst_10 [2] : vector<4x16x16xf32> to vector<4x16xf32>
    %15 = vector.shape_cast %14 : vector<4x16xf32> to vector<4x16x1xf32>
    %16 = vector.broadcast %15 : vector<4x16x1xf32> to vector<4x16x16xf32>
    %17 = arith.subf %13, %16 : vector<4x16x16xf32>
    %18 = math.exp %17 : vector<4x16x16xf32>
    %cst_11 = arith.constant dense<0.000000e+00> : vector<4x16xf32>
    %19 = vector.multi_reduction <add>, %18, %cst_11 [2] : vector<4x16x16xf32> to vector<4x16xf32>
    %20 = vector.shape_cast %19 : vector<4x16xf32> to vector<4x16x1xf32>
    %21 = tpu.reciprocal %20 {approx = true} : vector<4x16x1xf32> -> vector<4x16x1xf32>
    %22 = vector.broadcast %21 : vector<4x16x1xf32> to vector<4x16x16xf32>
    %23 = arith.mulf %18, %22 : vector<4x16x16xf32>
    %cst_12 = arith.constant dense<0.000000e+00> : vector<4x16x8xf32>
    %24 = tpu.matmul %23, %2, %cst_12 {dimension_numbers = #tpu.dot_dimension_numbers<[2], [1], [1], [2], [0, 0, 0, 1, 1, 2], [0], [0]>} : vector<4x16x16xf32>, vector<4x16x8xf32>, vector<4x16x8xf32> -> vector<4x16x8xf32>
    %c0_13 = arith.constant 0 : index
    %c0_14 = arith.constant 0 : index
    %c0_15 = arith.constant 0 : index
    %25 = vector.load %arg4[%c0_13, %c0_14, %c0_15] : memref<4x16x8xf32, #tpu.memory_space<vmem>>, vector<4x16x8xf32>
    tpu.vector_store %arg4[%c0_13, %c0_14, %c0_15], %24 {strides = array<i32>} : memref<4x16x8xf32, #tpu.memory_space<vmem>>, vector<4x16x8xf32>,
    return
  }
  func.func @transform_0(%arg0: i32) -> (i32, i32, i32) {
    %c0_i32 = arith.constant 0 : i32
    %c0_i32_0 = arith.constant 0 : i32
    %c0_i32_1 = arith.constant 0 : i32
    return %arg0, %c0_i32, %c0_i32_0 : i32, i32, i32
  }
  func.func @transform_1(%arg0: i32) -> (i32, i32, i32) {
    %c0_i32 = arith.constant 0 : i32
    %c0_i32_0 = arith.constant 0 : i32
    %c0_i32_1 = arith.constant 0 : i32
    return %arg0, %c0_i32, %c0_i32_0 : i32, i32, i32
  }
  func.func @transform_2(%arg0: i32) -> (i32, i32, i32) {
    %c0_i32 = arith.constant 0 : i32
    %c0_i32_0 = arith.constant 0 : i32
    %c0_i32_1 = arith.constant 0 : i32
    return %arg0, %c0_i32, %c0_i32_0 : i32, i32, i32
  }
  func.func @transform_3(%arg0: i32) -> (i32, i32, i32) {
    %c0_i32 = arith.constant 0 : i32
    %c0_i32_0 = arith.constant 0 : i32
    %c0_i32_1 = arith.constant 0 : i32
    return %arg0, %c0_i32, %c0_i32_0 : i32, i32, i32
  }
}

</mosaic_0001>

<llo_original>
// kernel: tpu_custom_call.1
$region0: #{tpu_custom_call.1}
  #allocation0 [shape = 'u32[]', space=smem, size = 0x4, offset = 0x4, fixed_abs, tag = 'smem constant byte address 0x4 - core index']
  #allocation1 [shape = 'u32[72,128]{1,0:T(1,128)}', space=vmem, size = 0x9000, scoped, tag = 'internal scratch']
  %s0 = inlined_call_operand.vmem [shape: f32[8,16,8], index: 0, kind: input, shape index: {}]
  %s1 = inlined_call_operand.vmem [shape: f32[8,16,8], index: 1, kind: input, shape index: {}]
  %s2 = inlined_call_operand.vmem [shape: f32[8,16,8], index: 2, kind: input, shape index: {}]
  %s3 = inlined_call_operand.vmem [shape: f32[8,16,8], index: 3, kind: output, shape index: {}]
  %s4 = sld [smem:[#allocation0]]
  $region45: #{tpu_custom_call.1} parent=0
    _
  %s6 = ssub.s32 1, %s4
  %s7 = scalar_select 0, %s6, %s4
  loop: start=0, step=1, limit=4
  $region2: #{tpu_custom_call.1} parent=0 // loop_pre_header
    _
  $region3: #{tpu_custom_call.1} parent=0 // loop_header
    %s9 = sphi 0, %s13
    %p10 = scmp.ge.s32.totalorder %s9, 4
    %s19 = sphi 0, %s21
    %s22 = sphi 0, %s19
    %s23 = sphi 0, %s22
    %s39 = sphi 0, %s23
    %s45 = sphi 0, %s47
    %s48 = sphi 0, %s45
    %s49 = sphi 0, %s48
    %s65 = sphi 0, %s49
    %s71 = sphi 0, %s73
    %s74 = sphi 0, %s71
    %s75 = sphi 0, %s74
    %s91 = sphi 0, %s75
    %s97 = sphi 0, %s99
    %s100 = sphi 0, %s97
    %s101 = sphi 0, %s100
    %s117 = sphi 0, %s101
  $region4: #{tpu_custom_call.1} parent=0 // loop_header_branch
    %12 = sbr.rel (%p10) target = $region8
  $region5: #{tpu_custom_call.1} parent=0 // loop_body
    %s14 = ssub.s32 %s9, 1
    %s15 = ssub.s32 %s9, 2
    %s16 = sadd.s32 %s9, 1
    %s17 = ssub.s32 %s9, %s16
    %p18 = scmp.eq.s32.totalorder %s17, 0
    %s20 = sadd.s32 %s19, 1
    %s21 = scalar_select %p18, %s19, %s20
    %p24 = pneg %p18
    %p25 = scmp.eq.s32.totalorder %s9, 1
    %p26 = por %p24, %p25
    %p27 = scmp.ne.s32.totalorder %s19, %s22
    %p28 = scmp.eq.s32.totalorder %s9, 0
    %p29 = por %p27, %p28
    %p30 = scmp.ne.s32.totalorder %s19, %s22
    %p31 = scmp.eq.s32.totalorder %s14, 1
    %p32 = por %p30, %p31
    %p33 = scmp.ne.s32.totalorder %s22, %s23
    %p34 = scmp.eq.s32.totalorder %s14, 0
    %p35 = por %p33, %p34
    %p36 = scmp.ne.s32.totalorder %s22, %s23
    %p37 = scmp.eq.s32.totalorder %s15, 1
    %p38 = por %p36, %p37
    %p40 = scmp.ne.s32.totalorder %s23, %s39
    %p41 = scmp.eq.s32.totalorder %s15, 0
    %p42 = por %p40, %p41
    %s43 = ssub.s32 %s9, %s16
    %p44 = scmp.eq.s32.totalorder %s43, 0
    %s46 = sadd.s32 %s45, 1
    %s47 = scalar_select %p44, %s45, %s46
    %p50 = pneg %p44
    %p51 = scmp.eq.s32.totalorder %s9, 1
    %p52 = por %p50, %p51
    %p53 = scmp.ne.s32.totalorder %s45, %s48
    %p54 = scmp.eq.s32.totalorder %s9, 0
    %p55 = por %p53, %p54
    %p56 = scmp.ne.s32.totalorder %s45, %s48
    %p57 = scmp.eq.s32.totalorder %s14, 1
    %p58 = por %p56, %p57
    %p59 = scmp.ne.s32.totalorder %s48, %s49
    %p60 = scmp.eq.s32.totalorder %s14, 0
    %p61 = por %p59, %p60
    %p62 = scmp.ne.s32.totalorder %s48, %s49
    %p63 = scmp.eq.s32.totalorder %s15, 1
    %p64 = por %p62, %p63
    %p66 = scmp.ne.s32.totalorder %s49, %s65
    %p67 = scmp.eq.s32.totalorder %s15, 0
    %p68 = por %p66, %p67
    %s69 = ssub.s32 %s9, %s16
    %p70 = scmp.eq.s32.totalorder %s69, 0
    %s72 = sadd.s32 %s71, 1
    %s73 = scalar_select %p70, %s71, %s72
    %p76 = pneg %p70
    %p77 = scmp.eq.s32.totalorder %s9, 1
    %p78 = por %p76, %p77
    %p79 = scmp.ne.s32.totalorder %s71, %s74
    %p80 = scmp.eq.s32.totalorder %s9, 0
    %p81 = por %p79, %p80
    %p82 = scmp.ne.s32.totalorder %s71, %s74
    %p83 = scmp.eq.s32.totalorder %s14, 1
    %p84 = por %p82, %p83
    %p85 = scmp.ne.s32.totalorder %s74, %s75
    %p86 = scmp.eq.s32.totalorder %s14, 0
    %p87 = por %p85, %p86
    %p88 = scmp.ne.s32.totalorder %s74, %s75
    %p89 = scmp.eq.s32.totalorder %s15, 1
    %p90 = por %p88, %p89
    %p92 = scmp.ne.s32.totalorder %s75, %s91
    %p93 = scmp.eq.s32.totalorder %s15, 0
    %p94 = por %p92, %p93
    %s95 = ssub.s32 %s9, %s16
    %p96 = scmp.eq.s32.totalorder %s95, 0
    %s98 = sadd.s32 %s97, 1
    %s99 = scalar_select %p96, %s97, %s98
    %p102 = pneg %p96
    %p103 = scmp.eq.s32.totalorder %s9, 1
    %p104 = por %p102, %p103
    %p105 = scmp.ne.s32.totalorder %s97, %s100
    %p106 = scmp.eq.s32.totalorder %s9, 0
    %p107 = por %p105, %p106
    %p108 = scmp.ne.s32.totalorder %s97, %s100
    %p109 = scmp.eq.s32.totalorder %s14, 1
    %p110 = por %p108, %p109
    %p111 = scmp.ne.s32.totalorder %s100, %s101
    %p112 = scmp.eq.s32.totalorder %s14, 0
    %p113 = por %p111, %p112
    %p114 = scmp.ne.s32.totalorder %s100, %s101
    %p115 = scmp.eq.s32.totalorder %s15, 1
    %p116 = por %p114, %p115
    %p118 = scmp.ne.s32.totalorder %s101, %s117
    %p119 = scmp.eq.s32.totalorder %s15, 0
    %p120 = por %p118, %p119
    %p121 = scmp.le.s32.totalorder 1, %s9
    %p122 = scmp.lt.s32.totalorder %s9, 3
    %p123 = pnand %p121, %p122
    %p124 = pneg %p123
    // Predicated region
    $region9: #{tpu_custom_call.1} parent=5 // pred_check
      _
    $region10: #{tpu_custom_call.1} parent=5 // pred_check_branch
      %126 = sbr.rel (%p123) target = $region12
    $region11: #{tpu_custom_call.1} parent=5 // pred_region
      %s127 = ssub.s32 %s9, 1
    $region12: #{tpu_custom_call.1} parent=5 // pred_fallthru
      _
    %p128 = scmp.lt.s32.totalorder %s9, 2
    // Predicated region
    $region13: #{tpu_custom_call.1} parent=5 // pred_check
      %p129 = pneg %p128
    $region14: #{tpu_custom_call.1} parent=5 // pred_check_branch
      %131 = sbr.rel (%p129) target = $region16
    $region15: #{tpu_custom_call.1} parent=5 // pred_region
      // Predicated region
      $region17: #{tpu_custom_call.1} parent=15 // pred_check
        %p132 = pneg %p29
      $region18: #{tpu_custom_call.1} parent=15 // pred_check_branch
        %134 = sbr.rel (%p132) target = $region20
      $region19: #{tpu_custom_call.1} parent=15 // pred_region
        %s135 = smul.u32 4, %s9
        %p136 = scmp.lt.s32.totalorder %s135, 7
        %s137 = scalar_select %p136, %s135, 7
        %s138 = smul.addr %s137, 2
        %s139 = smul.addr %s138, 8
        %s140 = scalar_lea.vmem %s0, %s139
        %s141 = smul.u32 4, %s9
      $region20: #{tpu_custom_call.1} parent=15 // pred_fallthru
        _
      // Predicated region
      $region21: #{tpu_custom_call.1} parent=15 // pred_check
        %p142 = pneg %p55
      $region22: #{tpu_custom_call.1} parent=15 // pred_check_branch
        %144 = sbr.rel (%p142) target = $region24
      $region23: #{tpu_custom_call.1} parent=15 // pred_region
        %s145 = smul.u32 4, %s9
        %p146 = scmp.lt.s32.totalorder %s145, 7
        %s147 = scalar_select %p146, %s145, 7
        %s148 = smul.addr %s147, 2
        %s149 = smul.addr %s148, 8
        %s150 = scalar_lea.vmem %s1, %s149
        %s151 = smul.u32 4, %s9
      $region24: #{tpu_custom_call.1} parent=15 // pred_fallthru
        _
      // Predicated region
      $region25: #{tpu_custom_call.1} parent=15 // pred_check
        %p152 = pneg %p81
      $region26: #{tpu_custom_call.1} parent=15 // pred_check_branch
        %154 = sbr.rel (%p152) target = $region28
      $region27: #{tpu_custom_call.1} parent=15 // pred_region
        %s155 = smul.u32 4, %s9
        %p156 = scmp.lt.s32.totalorder %s155, 7
        %s157 = scalar_select %p156, %s155, 7
        %s158 = smul.addr %s157, 2
        %s159 = smul.addr %s158, 8
        %s160 = scalar_lea.vmem %s2, %s159
        %s161 = smul.u32 4, %s9
      $region28: #{tpu_custom_call.1} parent=15 // pred_fallthru
        _
    $region16: #{tpu_custom_call.1} parent=5 // pred_fallthru
      _
    %p162 = scmp.le.s32.totalorder 1, %s9
    %p163 = scmp.lt.s32.totalorder %s9, 3
    %p164 = pnand %p162, %p163
    %p165 = pneg %p164
    // Predicated region
    $region29: #{tpu_custom_call.1} parent=5 // pred_check
      _
    $region30: #{tpu_custom_call.1} parent=5 // pred_check_branch
      %167 = sbr.rel (%p164) target = $region32
    $region31: #{tpu_custom_call.1} parent=5 // pred_region
      %s168 = ssub.s32 %s9, 1
      %s169 = smul.u32 4, %s14
      %p170 = scmp.lt.s32.totalorder %s169, 7
      %s171 = scalar_select %p170, %s169, 7
      %s172 = smul.addr %s171, 2
      %s173 = smul.addr %s172, 8
      %s174 = scalar_lea.vmem %s0, %s173
      %p175 = pneg %p35
      %p176 = pneg %p32
      %s177 = smul.u32 4, %s14
      %p178 = scmp.lt.s32.totalorder %s177, 7
      %s179 = scalar_select %p178, %s177, 7
      %s180 = smul.addr %s179, 2
      %s181 = smul.addr %s180, 8
      %s182 = scalar_lea.vmem %s1, %s181
      %p183 = pneg %p61
      %p184 = pneg %p58
      %s185 = smul.u32 4, %s14
      %p186 = scmp.lt.s32.totalorder %s185, 7
      %s187 = scalar_select %p186, %s185, 7
      %s188 = smul.addr %s187, 2
      %s189 = smul.addr %s188, 8
      %s190 = scalar_lea.vmem %s2, %s189
      %p191 = pneg %p87
      %p192 = pneg %p84
      %p193 = pneg %p113
      %p194 = pneg %p110
      %s195 = smul.u32 4, %s14
      %p196 = scmp.lt.s32.totalorder %s195, 7
      %s197 = scalar_select %p196, %s195, 7
      %s198 = smul.addr %s197, 2
      %s199 = smul.addr %s198, 8
      %s200 = scalar_lea.vmem %s3, %s199
      %s201 = smul.u32 4, %s14
      %p202 = scmp.lt.s32.totalorder %s201, 7
      %s203 = scalar_select %p202, %s201, 7
      %s204 = smul.addr %s203, 2
      %s205 = smul.addr %s204, 8
      %s206 = scalar_lea.vmem %s0, %s205
      %s207 = smul.u32 4, %s14
      %s208 = smul.u32 4, %s14
      %p209 = scmp.lt.s32.totalorder %s208, 7
      %s210 = scalar_select %p209, %s208, 7
      %s211 = smul.addr %s210, 2
      %s212 = smul.addr %s211, 8
      %s213 = scalar_lea.vmem %s1, %s212
      %s214 = smul.u32 4, %s14
      %s215 = smul.u32 4, %s14
      %p216 = scmp.lt.s32.totalorder %s215, 7
      %s217 = scalar_select %p216, %s215, 7
      %s218 = smul.addr %s217, 2
      %s219 = smul.addr %s218, 8
      %s220 = scalar_lea.vmem %s2, %s219
      %s221 = smul.u32 4, %s14
      %s222 = smul.u32 4, %s14
      %p223 = scmp.lt.s32.totalorder %s222, 7
      %s224 = scalar_select %p223, %s222, 7
      %s225 = smul.addr %s224, 2
      %s226 = smul.addr %s225, 8
      %s227 = scalar_lea.vmem %s3, %s226
      %s228 = smul.u32 4, %s14
      %v229 = vld [vmem:[%s206] sm:$0xff]
      %v230 = vld [vmem:[%s206 + $0x8] sm:$0xff]
      %v231 = vld [vmem:[%s206 + $0x10] sm:$0xff]
      %v232 = vld [vmem:[%s206 + $0x18] sm:$0xff]
      %v233 = vld [vmem:[%s206 + $0x20] sm:$0xff]
      %v234 = vld [vmem:[%s206 + $0x28] sm:$0xff]
      %v235 = vld [vmem:[%s206 + $0x30] sm:$0xff]
      %v236 = vld [vmem:[%s206 + $0x38] sm:$0xff]
      %v237 = vld [vmem:[%s213] sm:$0xff]
      %v238 = vld [vmem:[%s213 + $0x8] sm:$0xff]
      %v239 = vld [vmem:[%s213 + $0x10] sm:$0xff]
      %v240 = vld [vmem:[%s213 + $0x18] sm:$0xff]
      %v241 = vld [vmem:[%s213 + $0x20] sm:$0xff]
      %v242 = vld [vmem:[%s213 + $0x28] sm:$0xff]
      %v243 = vld [vmem:[%s213 + $0x30] sm:$0xff]
      %v244 = vld [vmem:[%s213 + $0x38] sm:$0xff]
      %v245 = vld [vmem:[%s220] sm:$0xff]
      %v246 = vld [vmem:[%s220 + $0x8] sm:$0xff]
      %v247 = vld [vmem:[%s220 + $0x10] sm:$0xff]
      %v248 = vld [vmem:[%s220 + $0x18] sm:$0xff]
      %v249 = vld [vmem:[%s220 + $0x20] sm:$0xff]
      %v250 = vld [vmem:[%s220 + $0x28] sm:$0xff]
      %v251 = vld [vmem:[%s220 + $0x30] sm:$0xff]
      %v252 = vld [vmem:[%s220 + $0x38] sm:$0xff]
      %vm253 = vcmask 64512
      %v255 = vsel %vm253, %v229, 0
      %v258 = vsel %vm253, %v230, 0
      %v261 = vsel %vm253, %v237, 0
      %v264 = vsel %vm253, %v238, 0
      %266 = vmatpush.xpose.msra.mxu0 0.0
      %267 = vmatpush.xpose.msra.mxu0 0.0
      %268 = vmatpush.xpose.msra.mxu0 0.0
      %269 = vmatpush.xpose.msra.mxu0 0.0
      %270 = vmatpush.xpose.msra.mxu0 0.0
      %271 = vmatpush.xpose.msra.mxu0 0.0
      %272 = vmatpush.xpose.msra.mxu0 0.0
      %273 = vmatpush.xpose.msra.mxu0 0.0
      %274 = vmatpush.xpose.msra.mxu0 0.0
      %275 = vmatpush.xpose.msra.mxu0 0.0
      %276 = vmatpush.xpose.msra.mxu0 0.0
      %277 = vmatpush.xpose.msra.mxu0 0.0
      %278 = vmatpush.xpose.msra.mxu0 0.0
      %279 = vmatpush.xpose.msra.mxu0 0.0
      %280 = vmatpush.xpose.msra.mxu0 %v264
      %281 = vmatpush.xpose.msra.mxu0 %v261
      %282 = vmatmul.f32.gmra.mxu0 %v255
      %v283 = vpop.f32.mrf.mxu0
      %v284 = vadd.f32 0.0, %v283
      %285 = vmatmul.f32.gmra.mxu0 %v258
      %v286 = vpop.f32.mrf.mxu0
      %v287 = vadd.f32 0.0, %v286
      %288 = vdwg.mxu0
      %v290 = vsel %vm253, %v231, 0
      %v293 = vsel %vm253, %v232, 0
      %v296 = vsel %vm253, %v239, 0
      %v299 = vsel %vm253, %v240, 0
      %301 = vmatpush.xpose.msra.mxu0 0.0
      %302 = vmatpush.xpose.msra.mxu0 0.0
      %303 = vmatpush.xpose.msra.mxu0 0.0
      %304 = vmatpush.xpose.msra.mxu0 0.0
      %305 = vmatpush.xpose.msra.mxu0 0.0
      %306 = vmatpush.xpose.msra.mxu0 0.0
      %307 = vmatpush.xpose.msra.mxu0 0.0
      %308 = vmatpush.xpose.msra.mxu0 0.0
      %309 = vmatpush.xpose.msra.mxu0 0.0
      %310 = vmatpush.xpose.msra.mxu0 0.0
      %311 = vmatpush.xpose.msra.mxu0 0.0
      %312 = vmatpush.xpose.msra.mxu0 0.0
      %313 = vmatpush.xpose.msra.mxu0 0.0
      %314 = vmatpush.xpose.msra.mxu0 0.0
      %315 = vmatpush.xpose.msra.mxu0 %v299
      %316 = vmatpush.xpose.msra.mxu0 %v296
      %317 = vmatmul.f32.gmra.mxu0 %v290
      %v318 = vpop.f32.mrf.mxu0
      %v319 = vadd.f32 0.0, %v318
      %320 = vmatmul.f32.gmra.mxu0 %v293
      %v321 = vpop.f32.mrf.mxu0
      %v322 = vadd.f32 0.0, %v321
      %323 = vdwg.mxu0
      %v325 = vsel %vm253, %v233, 0
      %v328 = vsel %vm253, %v234, 0
      %v331 = vsel %vm253, %v241, 0
      %v334 = vsel %vm253, %v242, 0
      %336 = vmatpush.xpose.msra.mxu0 0.0
      %337 = vmatpush.xpose.msra.mxu0 0.0
      %338 = vmatpush.xpose.msra.mxu0 0.0
      %339 = vmatpush.xpose.msra.mxu0 0.0
      %340 = vmatpush.xpose.msra.mxu0 0.0
      %341 = vmatpush.xpose.msra.mxu0 0.0
      %342 = vmatpush.xpose.msra.mxu0 0.0
      %343 = vmatpush.xpose.msra.mxu0 0.0
      %344 = vmatpush.xpose.msra.mxu0 0.0
      %345 = vmatpush.xpose.msra.mxu0 0.0
      %346 = vmatpush.xpose.msra.mxu0 0.0
      %347 = vmatpush.xpose.msra.mxu0 0.0
      %348 = vmatpush.xpose.msra.mxu0 0.0
      %349 = vmatpush.xpose.msra.mxu0 0.0
      %350 = vmatpush.xpose.msra.mxu0 %v334
      %351 = vmatpush.xpose.msra.mxu0 %v331
      %352 = vmatmul.f32.gmra.mxu0 %v325
      %v353 = vpop.f32.mrf.mxu0
      %v354 = vadd.f32 0.0, %v353
      %355 = vmatmul.f32.gmra.mxu0 %v328
      %v356 = vpop.f32.mrf.mxu0
      %v357 = vadd.f32 0.0, %v356
      %358 = vdwg.mxu0
      %v360 = vsel %vm253, %v235, 0
      %v363 = vsel %vm253, %v236, 0
      %v366 = vsel %vm253, %v243, 0
      %v369 = vsel %vm253, %v244, 0
      %371 = vmatpush.xpose.msra.mxu0 0.0
      %372 = vmatpush.xpose.msra.mxu0 0.0
      %373 = vmatpush.xpose.msra.mxu0 0.0
      %374 = vmatpush.xpose.msra.mxu0 0.0
      %375 = vmatpush.xpose.msra.mxu0 0.0
      %376 = vmatpush.xpose.msra.mxu0 0.0
      %377 = vmatpush.xpose.msra.mxu0 0.0
      %378 = vmatpush.xpose.msra.mxu0 0.0
      %379 = vmatpush.xpose.msra.mxu0 0.0
      %380 = vmatpush.xpose.msra.mxu0 0.0
      %381 = vmatpush.xpose.msra.mxu0 0.0
      %382 = vmatpush.xpose.msra.mxu0 0.0
      %383 = vmatpush.xpose.msra.mxu0 0.0
      %384 = vmatpush.xpose.msra.mxu0 0.0
      %385 = vmatpush.xpose.msra.mxu0 %v369
      %386 = vmatpush.xpose.msra.mxu0 %v366
      %387 = vmatmul.f32.gmra.mxu0 %v360
      %v388 = vpop.f32.mrf.mxu0
      %v389 = vadd.f32 0.0, %v388
      %390 = vmatmul.f32.gmra.mxu0 %v363
      %v391 = vpop.f32.mrf.mxu0
      %v392 = vadd.f32 0.0, %v391
      %393 = vdwg.mxu0
      %v394 = vmul.f32 %v284, 0.35355338
      %v395 = vmul.f32 %v287, 0.35355338
      %v396 = vmul.f32 %v319, 0.35355338
      %v397 = vmul.f32 %v322, 0.35355338
      %v398 = vmul.f32 %v354, 0.35355338
      %v399 = vmul.f32 %v357, 0.35355338
      %v400 = vmul.f32 %v389, 0.35355338
      %v401 = vmul.f32 %v392, 0.35355338
      %v402 = vlaneseq
      %v403 = vshrl.u32 %v402, 7
      %v404 = vadd.s32 %v403, 8
      %v405 = vlaneseq
      %v406 = vand.u32 %v405, 127
      %vm407 = vcmp.gt.s32.totalorder %v406, %v403
      %vm408 = vcmp.gt.s32.totalorder %v406, %v404
      %v409 = vsel %vm407, 1, 0
      %v410 = vsel %vm408, 1, 0
      %vm411 = vcmp.eq.s32.totalorder %v409, 1
      %vm412 = vcmp.eq.s32.totalorder %v410, 1
      %v413 = vsel %vm411, -inf, %v394
      %v414 = vsel %vm412, -inf, %v395
      %v415 = vsel %vm411, -inf, %v396
      %v416 = vsel %vm412, -inf, %v397
      %v417 = vsel %vm411, -inf, %v398
      %v418 = vsel %vm412, -inf, %v399
      %v419 = vsel %vm411, -inf, %v400
      %v420 = vsel %vm412, -inf, %v401
      %vm421 = vcmask 130048
      %v422 = vsel %vm421, %v413, -inf
      %423 = vmax.xlane.f32.xlu0 %v422
      %v424 = vpop.xlane.xlu0 %423
      %v425 = vsel %vm421, %v414, -inf
      %426 = vmax.xlane.f32.xlu0 %v425
      %v427 = vpop.xlane.xlu0 %426
      %v428 = vsel %vm421, %v415, -inf
      %429 = vmax.xlane.f32.xlu0 %v428
      %v430 = vpop.xlane.xlu0 %429
      %v431 = vsel %vm421, %v416, -inf
      %432 = vmax.xlane.f32.xlu0 %v431
      %v433 = vpop.xlane.xlu0 %432
      %v434 = vsel %vm421, %v417, -inf
      %435 = vmax.xlane.f32.xlu0 %v434
      %v436 = vpop.xlane.xlu0 %435
      %v437 = vsel %vm421, %v418, -inf
      %438 = vmax.xlane.f32.xlu0 %v437
      %v439 = vpop.xlane.xlu0 %438
      %v440 = vsel %vm421, %v419, -inf
      %441 = vmax.xlane.f32.xlu0 %v440
      %v442 = vpop.xlane.xlu0 %441
      %v443 = vsel %vm421, %v420, -inf
      %444 = vmax.xlane.f32.xlu0 %v443
      %v445 = vpop.xlane.xlu0 %444
      %v446 = vsub.f32 %v413, %v424
      %v447 = vsub.f32 %v414, %v427
      %v448 = vsub.f32 %v415, %v430
      %v449 = vsub.f32 %v416, %v433
      %v450 = vsub.f32 %v417, %v436
      %v451 = vsub.f32 %v418, %v439
      %v452 = vsub.f32 %v419, %v442
      %v453 = vsub.f32 %v420, %v445
      %v454 = vmul.f32 %v446, 1.442695
      %v455 = vpow.pop %v454
      %v456 = vmul.f32 %v447, 1.442695
      %v457 = vpow.pop %v456
      %v458 = vmul.f32 %v448, 1.442695
      %v459 = vpow.pop %v458
      %v460 = vmul.f32 %v449, 1.442695
      %v461 = vpow.pop %v460
      %v462 = vmul.f32 %v450, 1.442695
      %v463 = vpow.pop %v462
      %v464 = vmul.f32 %v451, 1.442695
      %v465 = vpow.pop %v464
      %v466 = vmul.f32 %v452, 1.442695
      %v467 = vpow.pop %v466
      %v468 = vmul.f32 %v453, 1.442695
      %v469 = vpow.pop %v468
      %v470 = vsel %vm421, %v455, 0.0
      %471 = vadd.xlane.f32.xlu0 %v470
      %v472 = vpop.xlane.xlu0 %471
      %v473 = vsel %vm421, %v457, 0.0
      %474 = vadd.xlane.f32.xlu0 %v473
      %v475 = vpop.xlane.xlu0 %474
      %v476 = vsel %vm421, %v459, 0.0
      %477 = vadd.xlane.f32.xlu0 %v476
      %v478 = vpop.xlane.xlu0 %477
      %v479 = vsel %vm421, %v461, 0.0
      %480 = vadd.xlane.f32.xlu0 %v479
      %v481 = vpop.xlane.xlu0 %480
      %v482 = vsel %vm421, %v463, 0.0
      %483 = vadd.xlane.f32.xlu0 %v482
      %v484 = vpop.xlane.xlu0 %483
      %v485 = vsel %vm421, %v465, 0.0
      %486 = vadd.xlane.f32.xlu0 %v485
      %v487 = vpop.xlane.xlu0 %486
      %v488 = vsel %vm421, %v467, 0.0
      %489 = vadd.xlane.f32.xlu0 %v488
      %v490 = vpop.xlane.xlu0 %489
      %v491 = vsel %vm421, %v469, 0.0
      %492 = vadd.xlane.f32.xlu0 %v491
      %v493 = vpop.xlane.xlu0 %492
      %v494 = vrcp.pop %v472
      %v495 = vrcp.pop %v475
      %v496 = vrcp.pop %v478
      %v497 = vrcp.pop %v481
      %v498 = vrcp.pop %v484
      %v499 = vrcp.pop %v487
      %v500 = vrcp.pop %v490
      %v501 = vrcp.pop %v493
      %v502 = vmul.f32 %v455, %v494
      %v503 = vmul.f32 %v457, %v495
      %v504 = vmul.f32 %v459, %v496
      %v505 = vmul.f32 %v461, %v497
      %v506 = vmul.f32 %v463, %v498
      %v507 = vmul.f32 %v465, %v499
      %v508 = vmul.f32 %v467, %v500
      %v509 = vmul.f32 %v469, %v501
      %v511 = vsel %vm421, %v502, 0
      %v514 = vsel %vm421, %v503, 0
      %516 = vmatpush.msra.mxu0 0.0
      %517 = vmatpush.msra.mxu0 0.0
      %518 = vmatpush.msra.mxu0 0.0
      %519 = vmatpush.msra.mxu0 0.0
      %520 = vmatpush.msra.mxu0 0.0
      %521 = vmatpush.msra.mxu0 0.0
      %522 = vmatpush.msra.mxu0 0.0
      %523 = vmatpush.msra.mxu0 0.0
      %524 = vmatpush.msra.mxu0 0.0
      %525 = vmatpush.msra.mxu0 0.0
      %526 = vmatpush.msra.mxu0 0.0
      %527 = vmatpush.msra.mxu0 0.0
      %528 = vmatpush.msra.mxu0 0.0
      %529 = vmatpush.msra.mxu0 0.0
      %530 = vmatpush.msra.mxu0 %v246
      %531 = vmatpush.msra.mxu0 %v245
      %532 = vmatmul.f32.gmra.mxu0 %v511
      %v533 = vpop.f32.mrf.mxu0
      %v534 = vadd.f32 0.0, %v533
      %535 = vmatmul.f32.gmra.mxu0 %v514
      %v536 = vpop.f32.mrf.mxu0
      %v537 = vadd.f32 0.0, %v536
      %538 = vdwg.mxu0
      %v540 = vsel %vm421, %v504, 0
      %v543 = vsel %vm421, %v505, 0
      %545 = vmatpush.msra.mxu0 0.0
      %546 = vmatpush.msra.mxu0 0.0
      %547 = vmatpush.msra.mxu0 0.0
      %548 = vmatpush.msra.mxu0 0.0
      %549 = vmatpush.msra.mxu0 0.0
      %550 = vmatpush.msra.mxu0 0.0
      %551 = vmatpush.msra.mxu0 0.0
      %552 = vmatpush.msra.mxu0 0.0
      %553 = vmatpush.msra.mxu0 0.0
      %554 = vmatpush.msra.mxu0 0.0
      %555 = vmatpush.msra.mxu0 0.0
      %556 = vmatpush.msra.mxu0 0.0
      %557 = vmatpush.msra.mxu0 0.0
      %558 = vmatpush.msra.mxu0 0.0
      %559 = vmatpush.msra.mxu0 %v248
      %560 = vmatpush.msra.mxu0 %v247
      %561 = vmatmul.f32.gmra.mxu0 %v540
      %v562 = vpop.f32.mrf.mxu0
      %v563 = vadd.f32 0.0, %v562
      %564 = vmatmul.f32.gmra.mxu0 %v543
      %v565 = vpop.f32.mrf.mxu0
      %v566 = vadd.f32 0.0, %v565
      %567 = vdwg.mxu0
      %v569 = vsel %vm421, %v506, 0
      %v572 = vsel %vm421, %v507, 0
      %574 = vmatpush.msra.mxu0 0.0
      %575 = vmatpush.msra.mxu0 0.0
      %576 = vmatpush.msra.mxu0 0.0
      %577 = vmatpush.msra.mxu0 0.0
      %578 = vmatpush.msra.mxu0 0.0
      %579 = vmatpush.msra.mxu0 0.0
      %580 = vmatpush.msra.mxu0 0.0
      %581 = vmatpush.msra.mxu0 0.0
      %582 = vmatpush.msra.mxu0 0.0
      %583 = vmatpush.msra.mxu0 0.0
      %584 = vmatpush.msra.mxu0 0.0
      %585 = vmatpush.msra.mxu0 0.0
      %586 = vmatpush.msra.mxu0 0.0
      %587 = vmatpush.msra.mxu0 0.0
      %588 = vmatpush.msra.mxu0 %v250
      %589 = vmatpush.msra.mxu0 %v249
      %590 = vmatmul.f32.gmra.mxu0 %v569
      %v591 = vpop.f32.mrf.mxu0
      %v592 = vadd.f32 0.0, %v591
      %593 = vmatmul.f32.gmra.mxu0 %v572
      %v594 = vpop.f32.mrf.mxu0
      %v595 = vadd.f32 0.0, %v594
      %596 = vdwg.mxu0
      %v598 = vsel %vm421, %v508, 0
      %v601 = vsel %vm421, %v509, 0
      %603 = vmatpush.msra.mxu0 0.0
      %604 = vmatpush.msra.mxu0 0.0
      %605 = vmatpush.msra.mxu0 0.0
      %606 = vmatpush.msra.mxu0 0.0
      %607 = vmatpush.msra.mxu0 0.0
      %608 = vmatpush.msra.mxu0 0.0
      %609 = vmatpush.msra.mxu0 0.0
      %610 = vmatpush.msra.mxu0 0.0
      %611 = vmatpush.msra.mxu0 0.0
      %612 = vmatpush.msra.mxu0 0.0
      %613 = vmatpush.msra.mxu0 0.0
      %614 = vmatpush.msra.mxu0 0.0
      %615 = vmatpush.msra.mxu0 0.0
      %616 = vmatpush.msra.mxu0 0.0
      %617 = vmatpush.msra.mxu0 %v252
      %618 = vmatpush.msra.mxu0 %v251
      %619 = vmatmul.f32.gmra.mxu0 %v598
      %v620 = vpop.f32.mrf.mxu0
      %v621 = vadd.f32 0.0, %v620
      %622 = vmatmul.f32.gmra.mxu0 %v601
      %v623 = vpop.f32.mrf.mxu0
      %v624 = vadd.f32 0.0, %v623
      %625 = vdwg.mxu0
      %626 = vst.msk [vmem:[%s227] sm:$0xff] %vm253, %v534
      %627 = vst.msk [vmem:[%s227 + $0x8] sm:$0xff] %vm253, %v537
      %628 = vst.msk [vmem:[%s227 + $0x10] sm:$0xff] %vm253, %v563
      %629 = vst.msk [vmem:[%s227 + $0x18] sm:$0xff] %vm253, %v566
      %630 = vst.msk [vmem:[%s227 + $0x20] sm:$0xff] %vm253, %v592
      %631 = vst.msk [vmem:[%s227 + $0x28] sm:$0xff] %vm253, %v595
      %632 = vst.msk [vmem:[%s227 + $0x30] sm:$0xff] %vm253, %v621
      %633 = vst.msk [vmem:[%s227 + $0x38] sm:$0xff] %vm253, %v624
      %s634 = smul.u32 4, %s14
      %p635 = scmp.lt.s32.totalorder %s634, 7
      %s636 = scalar_select %p635, %s634, 7
      %s637 = smul.addr %s636, 2
      %s638 = smul.addr %s637, 8
      %s639 = scalar_lea.vmem %s3, %s638
      // Predicated region
      $region33: #{tpu_custom_call.1} parent=31 // pred_check
        %p640 = pneg %p110
      $region34: #{tpu_custom_call.1} parent=31 // pred_check_branch
        %642 = sbr.rel (%p640) target = $region36
      $region35: #{tpu_custom_call.1} parent=31 // pred_region
        %s643 = smul.u32 4, %s14
      $region36: #{tpu_custom_call.1} parent=31 // pred_fallthru
        _
    $region32: #{tpu_custom_call.1} parent=5 // pred_fallthru
      _
    %p644 = scmp.le.s32.totalorder 2, %s9
    // Predicated region
    $region37: #{tpu_custom_call.1} parent=5 // pred_check
      %p645 = pneg %p644
    $region38: #{tpu_custom_call.1} parent=5 // pred_check_branch
      %647 = sbr.rel (%p645) target = $region40
    $region39: #{tpu_custom_call.1} parent=5 // pred_region
      %s648 = ssub.s32 %s9, 2
      // Predicated region
      $region41: #{tpu_custom_call.1} parent=39 // pred_check
        %p649 = pneg %p116
      $region42: #{tpu_custom_call.1} parent=39 // pred_check_branch
        %651 = sbr.rel (%p649) target = $region44
      $region43: #{tpu_custom_call.1} parent=39 // pred_region
        %s652 = smul.u32 4, %s15
        %p653 = scmp.lt.s32.totalorder %s652, 7
        %s654 = scalar_select %p653, %s652, 7
        %s655 = smul.addr %s654, 2
        %s656 = smul.addr %s655, 8
        %s657 = scalar_lea.vmem %s3, %s656
      $region44: #{tpu_custom_call.1} parent=39 // pred_fallthru
        _
    $region40: #{tpu_custom_call.1} parent=5 // pred_fallthru
      _
  $region6: #{tpu_custom_call.1} parent=0 // loop_footer
    %s13 = sadd.s32 1, %s9
  $region7: #{tpu_custom_call.1} parent=0 // loop_footer_branch
    %8 = sbr.rel target = $region3
  $region8: #{tpu_custom_call.1} parent=0 // loop_exit
    _

</llo_original>
